<compile_context>
chip_gen: v7x
topology: tpu7x:2x2x1
jax: 0.10.0
libtpu: 0.0.40
codegen_flags: <defaults>
</compile_context>

<pallas_src>
import functools

import jax
import jax.numpy as jnp
from jax.experimental import pallas as pl
from jax.experimental.pallas import tpu as pltpu

_LANE = 128


def _rmsnorm_kernel(x_ref, w_ref, o_ref, *, eps, inv_dim, low_precision_out):
    # x_ref: (row_tile, dim_pad) block in VMEM
    # w_ref: (1, dim_pad) weight block (constant block index -> no re-DMA)
    x = x_ref[...]
    xf = x.astype(jnp.float32)
    # sum-of-squares * (1/dim) instead of mean: avoids a per-row divide.
    ms = jnp.sum(xf * xf, axis=-1, keepdims=True) * inv_dim     # (row_tile, 1)
    inv = jax.lax.rsqrt(ms + eps)                               # EUP, ~free
    if low_precision_out:
        # Keep only the reduction in f32; normalize in the input dtype so no
        # full-tile f32 copy is materialized (bf16-native VPU on v6e/v7x).
        scale = inv.astype(x.dtype)                             # (row_tile, 1)
        w = w_ref[...].astype(x.dtype)                          # (1, dim_pad)
        o_ref[...] = (x * scale * w).astype(o_ref.dtype)
    else:
        w = w_ref[...].astype(jnp.float32)
        o_ref[...] = (xf * inv * w).astype(o_ref.dtype)


def _cdiv(a, b):
    return -(-a // b)


def _round_up(x, m):
    return ((x + m - 1) // m) * m


def _tpu_vmem_info():
    """Returns (vmem_budget_bytes, is_small_vmem_multi_core_part)."""
    default_cap = 64 * 1024 * 1024  # conservative: v7x per-TC physical VMEM
    detected = False
    cap = default_cap
    try:
        cap = int(pltpu.get_tpu_info().vmem_capacity_bytes)
        detected = True
    except Exception:
        pass
    # Leave ~20% headroom for compiler-internal scratch / semaphores / spill.
    budget = int(cap * 0.8)
    # Heuristic: <=96 MiB per-core VMEM => v7x-class part (2 TCs/chip).
    small_multicore = detected and cap <= 96 * 1024 * 1024
    return budget, small_multicore


def _choose_row_tile(n_rows, dim_pad, itemsize, vmem_budget):
    # Sublane packing: f32 rows come in multiples of 8; bf16 packs 2/row,
    # int8 packs 4/row.
    mult = 8 if itemsize >= 4 else (16 if itemsize == 2 else 32)
    in_row_bytes = dim_pad * itemsize
    # Per-row VMEM footprint: double-buffered input + output tiles plus ~2
    # f32-wide compute intermediates (single-buffered scratch).
    per_row_vmem = 4 * in_row_bytes + 2 * dim_pad * 4
    headroom = 2 << 20
    rows_vmem = max(mult, (vmem_budget - headroom) // per_row_vmem)
    # Purely bytes-based target (no hard row cap): ~16 MiB of input per grid
    # step fully amortizes the ~0.35 us/step pipeline overhead.
    rows_target = max(mult, (16 * 1024 * 1024) // max(1, in_row_bytes))
    rows = max(mult, (min(rows_vmem, rows_target) // mult) * mult)
    # Bound ragged-tail waste: redistribute rows evenly over the implied
    # block count so the masked final block isn't a nearly-empty DMA.
    nblocks = max(1, _cdiv(n_rows, rows))
    rows = max(mult, _round_up(_cdiv(n_rows, nblocks), mult))
    return rows


def rmsnorm(x, weight, eps=1e-6, *, row_tile=None):
    """Apply RMSNorm over the last axis of x. x: (..., dim), weight: (dim,)."""
    orig_shape = x.shape
    dim = orig_shape[-1]
    x2d = x.reshape(-1, dim)
    n_rows = x2d.shape[0]
    itemsize = jnp.dtype(x.dtype).itemsize

    # Lane-dense feature axis: pad dim up to a multiple of 128 outside the
    # kernel. Zero columns don't change sum(x^2); inv_dim uses the true dim.
    dim_pad = _round_up(dim, _LANE)
    if dim_pad != dim:
        x2d = jnp.pad(x2d, ((0, 0), (0, dim_pad - dim)))
        weight = jnp.pad(weight, (0, dim_pad - dim))
    w2d = weight.reshape(1, dim_pad)

    vmem_budget, small_vmem_multicore = _tpu_vmem_info()
    if row_tile is None:
        row_tile = _choose_row_tile(n_rows, dim_pad, itemsize, vmem_budget)

    # No host-side row padding: Pallas masks the ragged last block.
    grid = (_cdiv(n_rows, row_tile),)

    # VMEM budget: 2x double-buffered input + 2x double-buffered output tiles,
    # ~2x f32 compute scratch (single-buffered), weight row, headroom; capped
    # at 80% of this generation's per-core VMEM.
    tile_bytes = row_tile * dim_pad * itemsize
    f32_tile_bytes = row_tile * dim_pad * 4
    vmem_limit = 4 * tile_bytes + 2 * f32_tile_bytes + 2 * dim_pad * 4 + (2 << 20)
    vmem_limit = int(min(max(vmem_limit, 4 << 20), vmem_budget))

    low_precision_out = bool(
        jnp.issubdtype(x.dtype, jnp.floating) and itemsize <= 2)

    # On v7x-class (2 TCs/chip, 64 MiB/TC) parts, CORE_PARALLEL guarantees the
    # row loop and its DMA streams split across both TensorCores.
    if small_vmem_multicore and grid[0] >= 2:
        dim_sem = (pltpu.CORE_PARALLEL,)
    else:
        dim_sem = ("parallel",)

    out = pl.pallas_call(
        functools.partial(
            _rmsnorm_kernel,
            eps=float(eps),
            inv_dim=1.0 / dim,
            low_precision_out=low_precision_out,
        ),
        out_shape=jax.ShapeDtypeStruct((n_rows, dim_pad), x.dtype),
        grid_spec=pltpu.PrefetchScalarGridSpec(
            num_scalar_prefetch=0,
            grid=grid,
            in_specs=[
                pl.BlockSpec((row_tile, dim_pad), lambda i: (i, 0)),
                pl.BlockSpec((1, dim_pad), lambda i: (0, 0)),
            ],
            out_specs=pl.BlockSpec((row_tile, dim_pad), lambda i: (i, 0)),
        ),
        compiler_params=pltpu.CompilerParams(
            dimension_semantics=dim_sem,
            vmem_limit_bytes=vmem_limit,
        ),
    )(x2d, w2d)

    if dim_pad != dim:
        out = out[:, :dim]
    return out.reshape(orig_shape)


def rmsnorm_ref(x, weight, eps=1e-6):
    xf = x.astype(jnp.float32)
    ms = jnp.mean(xf * xf, axis=-1, keepdims=True)
    return (xf * jax.lax.rsqrt(ms + eps) * weight.astype(jnp.float32)).astype(x.dtype)


if __name__ == "__main__":
    key = jax.random.PRNGKey(0)
    k1, k2, k3 = jax.random.split(key, 3)

    # 1) f32, lane-aligned dim (matches nn.Parameter(torch.ones(dim)) init).
    x = jax.random.normal(k1, (2, 8, 128), dtype=jnp.float32)
    w = jnp.ones((128,), dtype=jnp.float32)
    y = rmsnorm(x, w, eps=1e-6)
    jax.block_until_ready(y)
    assert y.shape == x.shape
    assert jnp.allclose(y, rmsnorm_ref(x, w), atol=1e-5, rtol=1e-5), "f32 mismatch"

    # 2) bf16 path: f32 reduction, low-precision normalization multiply.
    xb = jax.random.normal(k2, (2, 8, 256), dtype=jnp.bfloat16)
    wb = jnp.ones((256,), dtype=jnp.bfloat16)
    yb = rmsnorm(xb, wb, eps=1e-6)
    jax.block_until_ready(yb)
    assert yb.shape == xb.shape
    assert jnp.allclose(
        yb.astype(jnp.float32),
        rmsnorm_ref(xb, wb).astype(jnp.float32),
        atol=1e-1, rtol=5e-2,
    ), "bf16 mismatch"

    # 3) dim not a multiple of 128 -> padded to a lane-dense store, sliced back.
    xs = jax.random.normal(k3, (2, 8, 96), dtype=jnp.float32)
    ws = jnp.ones((96,), dtype=jnp.float32)
    ys = rmsnorm(xs, ws, eps=1e-6)
    jax.block_until_ready(ys)
    assert ys.shape == xs.shape
    assert jnp.allclose(ys, rmsnorm_ref(xs, ws), atol=1e-5, rtol=1e-5), "pad-dim mismatch"

    print("KERNEL_OK")
</pallas_src>

<mosaic_0001>
module attributes {stable_mosaic.version = 11 : i64} {
  func.func @_rmsnorm_kernel(%arg0: i32, %arg1: memref<16x128xf32, #tpu.memory_space<vmem>>, %arg2: memref<1x128xf32, #tpu.memory_space<vmem>>, %arg3: memref<16x128xf32, #tpu.memory_space<vmem>>) attributes {dimension_semantics = [#tpu.dimension_semantics<parallel>], iteration_bounds = array<i64: 1>, scalar_prefetch = 0 : i64, scratch_operands = 0 : i64, tpu.core_type = #tpu.core_type<tc>, window_params = [{transform_indices = @transform_0, window_bounds = array<i64: 16, 128>}, {pipeline_mode = #tpu.pipeline_mode<synchronous>, transform_indices = @transform_1, window_bounds = array<i64: 1, 128>}, {transform_indices = @transform_2, window_bounds = array<i64: 16, 128>}]} {
    %c0 = arith.constant 0 : index
    %c0_0 = arith.constant 0 : index
    %0 = vector.load %arg1[%c0, %c0_0] : memref<16x128xf32, #tpu.memory_space<vmem>>, vector<16x128xf32>
    %1 = arith.mulf %0, %0 : vector<16x128xf32>
    %cst = arith.constant dense<0.000000e+00> : vector<16xf32>
    %2 = vector.multi_reduction <add>, %1, %cst [1] : vector<16x128xf32> to vector<16xf32>
    %3 = vector.shape_cast %2 : vector<16xf32> to vector<16x1xf32>
    %cst_1 = arith.constant 7.812500e-03 : f32
    %4 = vector.broadcast %cst_1 : f32 to vector<16x1xf32>
    %5 = arith.mulf %3, %4 : vector<16x1xf32>
    %cst_2 = arith.constant 9.99999997E-7 : f32
    %6 = vector.broadcast %cst_2 : f32 to vector<16x1xf32>
    %7 = arith.addf %5, %6 : vector<16x1xf32>
    %8 = math.rsqrt %7 : vector<16x1xf32>
    %c0_3 = arith.constant 0 : index
    %c0_4 = arith.constant 0 : index
    %9 = vector.load %arg2[%c0_3, %c0_4] : memref<1x128xf32, #tpu.memory_space<vmem>>, vector<1x128xf32>
    %10 = vector.broadcast %8 : vector<16x1xf32> to vector<16x128xf32>
    %11 = arith.mulf %0, %10 : vector<16x128xf32>
    %12 = vector.broadcast %9 : vector<1x128xf32> to vector<16x128xf32>
    %13 = arith.mulf %11, %12 : vector<16x128xf32>
    %c0_5 = arith.constant 0 : index
    %c0_6 = arith.constant 0 : index
    %14 = vector.load %arg3[%c0_5, %c0_6] : memref<16x128xf32, #tpu.memory_space<vmem>>, vector<16x128xf32>
    tpu.vector_store %arg3[%c0_5, %c0_6], %13 {strides = array<i32>} : memref<16x128xf32, #tpu.memory_space<vmem>>, vector<16x128xf32>,
    return
  }
  func.func @transform_0(%arg0: i32) -> (i32, i32) {
    %c0_i32 = arith.constant 0 : i32
    %c0_i32_0 = arith.constant 0 : i32
    return %arg0, %c0_i32 : i32, i32
  }
  func.func @transform_1(%arg0: i32) -> (i32, i32) {
    %c0_i32 = arith.constant 0 : i32
    %c0_i32_0 = arith.constant 0 : i32
    %c0_i32_1 = arith.constant 0 : i32
    return %c0_i32, %c0_i32_0 : i32, i32
  }
  func.func @transform_2(%arg0: i32) -> (i32, i32) {
    %c0_i32 = arith.constant 0 : i32
    %c0_i32_0 = arith.constant 0 : i32
    return %arg0, %c0_i32 : i32, i32
  }
}

</mosaic_0001>

<llo_original>
// kernel: tpu_custom_call.1
$region0: #{tpu_custom_call.1}
  #allocation0 [shape = 'u32[]', space=smem, size = 0x4, offset = 0x4, fixed_abs, tag = 'smem constant byte address 0x4 - core index']
  #allocation1 [shape = 'u32[144,128]{1,0:T(1,128)}', space=vmem, size = 0x12000, scoped, tag = 'internal scratch']
  %s0 = inlined_call_operand.hbm [shape: f32[16,128], index: 0, kind: input, shape index: {}]
  %s1 = inlined_call_operand.vmem [shape: f32[1,128], index: 1, kind: input, shape index: {}]
  %s2 = inlined_call_operand.hbm [shape: f32[16,128], index: 2, kind: output, shape index: {}]
  %s3 = sld [smem:[#allocation0]]
  $region22: #{tpu_custom_call.1} parent=0
    _
  %s5 = ssub.s32 1, %s3
  %s6 = scalar_select 0, %s5, %s3
  $region1: #{tpu_custom_call.1} parent=0
    #allocation2 [shape = 'u8[8192]{0}', space=vmem, size = 0x2000, scoped, tag = 'input window, operand 0, single buffered']
    #allocation3 [shape = 's32[1]{0}', space=sflag, size = 0x4, scoped, tag = 'scoped memory for tpu_custom_call.1']
    #allocation4 [shape = 's32[1]{0}', space=sflag, size = 0x4, scoped, tag = 'scoped memory for tpu_custom_call.1']
    #allocation5 [shape = 'u8[8192]{0}', space=vmem, size = 0x2000, scoped, tag = 'output window, operand 0, single buffered']
    %7 = vsyncpa [#allocation3], 0
    %8 = vsyncpa [#allocation4], 0
    // Predicated region
    $region2: #{tpu_custom_call.1} parent=1 // pred_check
      _
    $region3: #{tpu_custom_call.1} parent=1 // pred_check_branch
      %10 = sbr.rel (0) target = $region5
    $region4: #{tpu_custom_call.1} parent=1 // pred_region
      %s12 = ssub.s32 256, 256
      %13 = vsyncadd [#allocation3], %s12
      %s14 = sshll.u32 [#allocation2], 4
      %s15 = int_to_ptr.vmem [resolvable:$true] %s14
      %20 = dma.hbm_to_vmem [thread:$0]  %s0, 256, %s15, [#allocation3], 128, 128, 8
    $region5: #{tpu_custom_call.1} parent=1 // pred_fallthru
      _
    // Predicated region
    $region6: #{tpu_custom_call.1} parent=1 // pred_check
      _
    $region7: #{tpu_custom_call.1} parent=1 // pred_check_branch
      %22 = sbr.rel (0) target = $region9
    $region8: #{tpu_custom_call.1} parent=1 // pred_region
      _
    $region9: #{tpu_custom_call.1} parent=1 // pred_fallthru
      _
    // Predicated region
    $region10: #{tpu_custom_call.1} parent=1 // pred_check
      _
    $region11: #{tpu_custom_call.1} parent=1 // pred_check_branch
      %24 = sbr.rel (0) target = $region13
    $region12: #{tpu_custom_call.1} parent=1 // pred_region
      %25 = dma.done [#allocation3], 256
    $region13: #{tpu_custom_call.1} parent=1 // pred_fallthru
      _
    %v26 = vld [vmem:[#allocation2] sm:$0xff]
    %v27 = vld [vmem:[#allocation2 + $0x8] sm:$0xff]
    %v28 = vmul.f32 %v26, %v26
    %v29 = vmul.f32 %v27, %v27
    %30 = vadd.xlane.f32.xlu0 %v28
    %v31 = vpop.xlane.xlu0 %30
    %32 = vadd.xlane.f32.xlu0 %v29
    %v33 = vpop.xlane.xlu0 %32
    %v34 = vmul.f32 %v31, 0.0078125
    %v35 = vmul.f32 %v33, 0.0078125
    %v36 = vadd.f32 %v34, 1e-06
    %v37 = vadd.f32 %v35, 1e-06
    %v38 = vrsqrt.pop %v36
    %v39 = vrsqrt.pop %v37
    %v40 = vld [vmem:[%s1] sm:$0x1]
    %v41 = vmul.f32 %v26, %v38
    %v42 = vmul.f32 %v27, %v39
    %v44 = vlaneseq
    %v45 = vshrl.u32 %v44, 7
    %v46 = vsub.s32 0, %v45
    %v47 = vrot.slane %v40, %v46
    %v49 = vmul.f32 %v41, %v47
    %v50 = vmul.f32 %v42, %v47
    %51 = vst [vmem:[#allocation5] sm:$0xff] %v49
    %52 = vst [vmem:[#allocation5 + $0x8] sm:$0xff] %v50
    // Predicated region
    $region14: #{tpu_custom_call.1} parent=1 // pred_check
      _
    $region15: #{tpu_custom_call.1} parent=1 // pred_check_branch
      %54 = sbr.rel (0) target = $region17
    $region16: #{tpu_custom_call.1} parent=1 // pred_region
      %s56 = ssub.s32 256, 256
      %57 = vsyncadd [#allocation4], %s56
      %s58 = sshll.u32 [#allocation5], 4
      %s59 = int_to_ptr.vmem [resolvable:$true] %s58
      %64 = dma.vmem_to_hbm [thread:$0]  %s59, 256, %s2, [#allocation4], 128, 128, 8
    $region17: #{tpu_custom_call.1} parent=1 // pred_fallthru
      _
    // Predicated region
    $region18: #{tpu_custom_call.1} parent=1 // pred_check
      _
    $region19: #{tpu_custom_call.1} parent=1 // pred_check_branch
      %66 = sbr.rel (0) target = $region21
    $region20: #{tpu_custom_call.1} parent=1 // pred_region
      %67 = dma.done [#allocation4], 256
    $region21: #{tpu_custom_call.1} parent=1 // pred_fallthru
      _
    %68 = vsyncpa [#allocation3], 1
    %69 = vsyncpa [#allocation4], 1

</llo_original>
